<compile_context>
chip_gen: v5e
topology: v5e:2x2
jax: 0.10.0
libtpu: 0.0.40
codegen_flags: <defaults>
</compile_context>

<pallas_src>
import functools

import numpy as np
import jax
import jax.numpy as jnp
from jax.experimental import pallas as pl
from jax.experimental.pallas import tpu as pltpu


# ----------------------------------------------------------------------------
# Pallas kernel: im2col + one long-K conv matmul + ReLU + fused 1x1 heads
# ----------------------------------------------------------------------------
def _rpn_head_kernel(xa_ref, xb_ref, w9_ref, b3_ref, wh_ref, bh_ref,
                     out_ref, slab_ref, *, wp, tc, cin):
    # Build the (9*Cin, tc) im2col slab:
    #   slab[(dy*3+dx)*Cin + c, m] = x_stitched[c, m + dy*wp + dx]
    # where x_stitched = [main column tile | halo block] along lanes.
    # Every tap offset o = dy*wp + dx satisfies o <= 2*wp + 2 <= hc <= tc,
    # so the halo block always covers the out-of-tile part.
    for dy in range(3):
        for dx in range(3):
            o = dy * wp + dx
            rows = slice((dy * 3 + dx) * cin, (dy * 3 + dx + 1) * cin)
            if o == 0:
                slab_ref[rows, :] = xa_ref[0]
            elif o < tc:
                slab_ref[rows, :tc - o] = xa_ref[0, :, o:tc]
                slab_ref[rows, tc - o:] = xb_ref[0, :, :o]
            else:  # o == tc (tile degenerated to the minimum halo width)
                slab_ref[rows, :] = xb_ref[0, :, :tc]

    # 3x3 conv: a single (Cin, 9*Cin) x (9*Cin, tc) bf16 matmul with all
    # accumulation done in the MXU f32 accumulator.
    acc = jnp.dot(w9_ref[...], slab_ref[...],
                  preferred_element_type=jnp.float32)
    t = jnp.maximum(acc + b3_ref[...], 0.0).astype(jnp.bfloat16)

    # Fused cls + bbox 1x1 heads: one (5A, Cin) x (Cin, tc) matmul,
    # one merged output block.
    head = jnp.dot(wh_ref[...], t, preferred_element_type=jnp.float32)
    out_ref[0] = (head + bh_ref[...]).astype(out_ref.dtype)


# ----------------------------------------------------------------------------
# Per-level wrapper: layout plumbing + pallas_call
# ----------------------------------------------------------------------------
@jax.jit
def _rpn_head_level(x, w9, b3, wh, bh):
    """x: (N, C, H, W) NCHW. Returns (cls (N,A,H,W), bbox (N,4A,H,W))."""
    N, C, H, W = x.shape
    A5 = wh.shape[0]                  # 5 * num_anchors (cls + bbox fused)

    wp = W + 2                        # padded width
    lout = H * wp                     # flattened output positions per image
    # Halo chunk: must cover the largest tap offset (2*wp + 2), lane-aligned.
    hc = -(-(2 * wp + 2) // 128) * 128
    # Main column tile: multiple of hc, large enough to amortize per-step
    # overhead, capped at ~1024 lanes so the bf16 blocks + im2col slab fit
    # the default scoped-VMEM limit on every TPU generation.
    cap = max(hc, (1024 // hc) * hc)
    if N == 1:
        # Single-image level: split the lane axis so both TensorCores (v7x)
        # get at least one grid step.
        cap = min(cap, max(hc, -(-lout // (2 * hc)) * hc))
    tc = min(-(-lout // hc) * hc, cap)
    n_tiles = -(-lout // tc)
    lout_pad = n_tiles * tc
    need = lout_pad + hc              # flat columns the blocks will touch

    # Single merged pad (conv padding=1 on all sides + enough extra zero rows
    # at the bottom that every (tile, halo) block is fully in-bounds), then a
    # free row-major reshape to the flattened padded-width layout.
    rows_total = -(-need // wp)
    bot = rows_total - (H + 1)        # >= 2 by construction
    xpad = jnp.pad(x.astype(jnp.bfloat16),
                   ((0, 0), (0, 0), (1, bot), (1, 1)))
    x_flat = xpad.reshape(N, C, rows_total * wp)

    ratio = tc // hc                  # exact: tc is a multiple of hc
    kernel = functools.partial(_rpn_head_kernel, wp=wp, tc=tc, cin=C)

    out = pl.pallas_call(
        kernel,
        out_shape=jax.ShapeDtypeStruct((N, A5, lout_pad), jnp.float32),
        grid_spec=pltpu.PrefetchScalarGridSpec(
            num_scalar_prefetch=0,
            grid=(N, n_tiles),
            in_specs=[
                # main column tile (bf16)
                pl.BlockSpec((1, C, tc), lambda n, j: (n, 0, j)),
                # halo chunk immediately after the main tile (non-overlapping
                # blocked view of the same array)
                pl.BlockSpec((1, C, hc), lambda n, j: (n, 0, (j + 1) * ratio)),
                # constant weight / bias blocks (DMA'd once: index never moves)
                pl.BlockSpec((C, 9 * C), lambda n, j: (0, 0)),
                pl.BlockSpec((C, 1), lambda n, j: (0, 0)),
                pl.BlockSpec((A5, C), lambda n, j: (0, 0)),
                pl.BlockSpec((A5, 1), lambda n, j: (0, 0)),
            ],
            out_specs=pl.BlockSpec((1, A5, tc), lambda n, j: (n, 0, j)),
            scratch_shapes=[pltpu.VMEM((9 * C, tc), jnp.bfloat16)],
        ),
        compiler_params=pltpu.CompilerParams(
            dimension_semantics=("parallel", "parallel"),
            vmem_limit_bytes=32 * 1024 * 1024),
    )(x_flat, x_flat, w9, b3, wh, bh)

    # Strip lane padding and split the fused heads.  Outputs are already in
    # NCHW order, so this is the only relayout needed.
    A = A5 // 5
    cls = out[:, :A, :lout].reshape(N, A, H, wp)[:, :, :, :W]
    bbox = out[:, A:, :lout].reshape(N, 4 * A, H, wp)[:, :, :, :W]
    return cls, bbox


# ----------------------------------------------------------------------------
# Module wrapper (mirrors the PyTorch RPNHead)
# ----------------------------------------------------------------------------
class RPNHead:
    """RPN head: shared 3x3 conv + ReLU, then 1x1 cls / bbox heads."""

    def __init__(self, in_channels, num_anchors, key=None):
        if key is None:
            key = jax.random.PRNGKey(0)
        k1, k2, k3 = jax.random.split(key, 3)
        C, A = in_channels, num_anchors
        self.in_channels = C
        self.num_anchors = A

        def init_w(k, shape):
            w = 0.01 * jax.random.normal(k, shape, dtype=jnp.float32)
            # Snap to bf16-representable values: the bf16 kernel path is then
            # lossless on the weights and the numeric self-check stays tight.
            return w.astype(jnp.bfloat16).astype(jnp.float32)

        # PyTorch-layout parameters (normal(std=0.01) weights, zero biases).
        self.conv_w = init_w(k1, (C, C, 3, 3))
        self.conv_b = jnp.zeros((C,), jnp.float32)
        self.cls_w = init_w(k2, (A, C, 1, 1))
        self.cls_b = jnp.zeros((A,), jnp.float32)
        self.bbox_w = init_w(k3, (4 * A, C, 1, 1))
        self.bbox_b = jnp.zeros((4 * A,), jnp.float32)

        # Kernel-friendly packed layouts, computed once (not per forward).
        #   w9[o, (dy*3+dx)*C + c] = conv_w[o, c, dy, dx]   (bf16 im2col K)
        self._w9 = jnp.transpose(self.conv_w, (0, 2, 3, 1)) \
                      .reshape(C, 9 * C).astype(jnp.bfloat16)
        self._b3 = self.conv_b.reshape(C, 1)                     # f32 bias
        #   fused cls+bbox head: (5A, C) bf16 weight, (5A, 1) f32 bias
        self._wh = jnp.concatenate(
            [self.cls_w.reshape(A, C), self.bbox_w.reshape(4 * A, C)],
            axis=0).astype(jnp.bfloat16)
        self._bh = jnp.concatenate(
            [self.cls_b, self.bbox_b]).reshape(5 * A, 1)

    def __call__(self, x):
        logits, bbox_reg = [], []
        for feature in x:
            c, b = _rpn_head_level(feature, self._w9, self._b3,
                                   self._wh, self._bh)
            logits.append(c)
            bbox_reg.append(b)
        return logits, bbox_reg


# ----------------------------------------------------------------------------
# Pure-numpy (float64) reference for verification
# ----------------------------------------------------------------------------
def _np_rpn_head(x, conv_w, conv_b, cls_w, cls_b, bbox_w, bbox_b):
    x = np.asarray(x, np.float64)
    conv_w = np.asarray(conv_w, np.float64)
    conv_b = np.asarray(conv_b, np.float64)
    cls_w = np.asarray(cls_w, np.float64)
    cls_b = np.asarray(cls_b, np.float64)
    bbox_w = np.asarray(bbox_w, np.float64)
    bbox_b = np.asarray(bbox_b, np.float64)

    N, C, H, W = x.shape
    xp = np.pad(x, ((0, 0), (0, 0), (1, 1), (1, 1)))
    t = np.zeros((N, conv_w.shape[0], H, W), np.float64)
    for dy in range(3):
        for dx in range(3):
            t += np.einsum('oc,nchw->nohw', conv_w[:, :, dy, dx],
                           xp[:, :, dy:dy + H, dx:dx + W])
    t += conv_b[None, :, None, None]
    t = np.maximum(t, 0.0)
    cls = np.einsum('oc,nchw->nohw', cls_w[:, :, 0, 0], t) \
        + cls_b[None, :, None, None]
    bbox = np.einsum('oc,nchw->nohw', bbox_w[:, :, 0, 0], t) \
        + bbox_b[None, :, None, None]
    return cls, bbox


if __name__ == "__main__":
    key = jax.random.PRNGKey(0)
    k_head, k0, k1 = jax.random.split(key, 3)

    in_channels, num_anchors = 4, 3
    head = RPNHead(in_channels, num_anchors, key=k_head)

    def make_fm(k, shape):
        v = jax.random.normal(k, shape, dtype=jnp.float32)
        return v.astype(jnp.bfloat16).astype(jnp.float32)

    # Two small feature levels, batch=2, channels=4 (NCHW like the reference).
    feature_maps = [make_fm(k0, (2, in_channels, 16, 16)),
                    make_fm(k1, (2, in_channels, 8, 8))]

    logits, bbox_reg = head(feature_maps)
    logits = [jax.block_until_ready(l) for l in logits]
    bbox_reg = [jax.block_until_ready(b) for b in bbox_reg]

    for fm, lg, bb in zip(feature_maps, logits, bbox_reg):
        ref_cls, ref_bbox = _np_rpn_head(fm, head.conv_w, head.conv_b,
                                         head.cls_w, head.cls_b,
                                         head.bbox_w, head.bbox_b)
        assert lg.shape == ref_cls.shape, (lg.shape, ref_cls.shape)
        assert bb.shape == ref_bbox.shape, (bb.shape, ref_bbox.shape)
        # Inputs/weights are bf16-exact and accumulation is f32; atol covers
        # the bf16 rounding of the intermediate ReLU activation feeding the
        # 1x1 heads.
        np.testing.assert_allclose(np.asarray(lg), ref_cls,
                                   rtol=1e-2, atol=2e-4)
        np.testing.assert_allclose(np.asarray(bb), ref_bbox,
                                   rtol=1e-2, atol=2e-4)

    print("KERNEL_OK")
</pallas_src>

<mosaic_0001>
module attributes {stable_mosaic.version = 11 : i64} {
  func.func @_rpn_head_kernel(%arg0: i32, %arg1: i32, %arg2: memref<1x4x384xbf16, #tpu.memory_space<vmem>>, %arg3: memref<1x4x128xbf16, #tpu.memory_space<vmem>>, %arg4: memref<4x36xbf16, #tpu.memory_space<vmem>>, %arg5: memref<4x1xf32, #tpu.memory_space<vmem>>, %arg6: memref<15x4xbf16, #tpu.memory_space<vmem>>, %arg7: memref<15x1xf32, #tpu.memory_space<vmem>>, %arg8: memref<1x15x384xf32, #tpu.memory_space<vmem>>, %arg9: memref<36x384xbf16, #tpu.memory_space<vmem>>) attributes {dimension_semantics = [#tpu.dimension_semantics<parallel>, #tpu.dimension_semantics<parallel>], iteration_bounds = array<i64: 2, 1>, scalar_prefetch = 0 : i64, scratch_operands = 1 : i64, tpu.core_type = #tpu.core_type<tc>, window_params = [{transform_indices = @transform_0, window_bounds = array<i64: 1, 4, 384>}, {transform_indices = @transform_1, window_bounds = array<i64: 1, 4, 128>}, {pipeline_mode = #tpu.pipeline_mode<synchronous>, transform_indices = @transform_2, window_bounds = array<i64: 4, 36>}, {pipeline_mode = #tpu.pipeline_mode<synchronous>, transform_indices = @transform_3, window_bounds = array<i64: 4, 1>}, {pipeline_mode = #tpu.pipeline_mode<synchronous>, transform_indices = @transform_4, window_bounds = array<i64: 15, 4>}, {pipeline_mode = #tpu.pipeline_mode<synchronous>, transform_indices = @transform_5, window_bounds = array<i64: 15, 1>}, {transform_indices = @transform_6, window_bounds = array<i64: 1, 15, 384>}]} {
    %c0 = arith.constant 0 : index
    %c0_0 = arith.constant 0 : index
    %c0_1 = arith.constant 0 : index
    %0 = vector.load %arg2[%c0, %c0_0, %c0_1] : memref<1x4x384xbf16, #tpu.memory_space<vmem>>, vector<1x4x384xbf16>
    %1 = vector.shape_cast %0 : vector<1x4x384xbf16> to vector<4x384xbf16>
    %c0_2 = arith.constant 0 : index
    %c0_3 = arith.constant 0 : index
    %2 = vector.load %arg9[%c0_2, %c0_3] : memref<36x384xbf16, #tpu.memory_space<vmem>>, vector<4x384xbf16>
    tpu.vector_store %arg9[%c0_2, %c0_3], %1 {strides = array<i32>} : memref<36x384xbf16, #tpu.memory_space<vmem>>, vector<4x384xbf16>,
    %c0_4 = arith.constant 0 : index
    %c0_5 = arith.constant 0 : index
    %c1 = arith.constant 1 : index
    %3 = vector.load %arg2[%c0_4, %c0_5, %c1] : memref<1x4x384xbf16, #tpu.memory_space<vmem>>, vector<1x4x383xbf16>
    %4 = vector.shape_cast %3 : vector<1x4x383xbf16> to vector<4x383xbf16>
    %c4 = arith.constant 4 : index
    %c0_6 = arith.constant 0 : index
    %5 = vector.load %arg9[%c4, %c0_6] : memref<36x384xbf16, #tpu.memory_space<vmem>>, vector<4x383xbf16>
    tpu.vector_store %arg9[%c4, %c0_6], %4 {strides = array<i32>} : memref<36x384xbf16, #tpu.memory_space<vmem>>, vector<4x383xbf16>,
    %c0_7 = arith.constant 0 : index
    %c0_8 = arith.constant 0 : index
    %c0_9 = arith.constant 0 : index
    %6 = vector.load %arg3[%c0_7, %c0_8, %c0_9] : memref<1x4x128xbf16, #tpu.memory_space<vmem>>, vector<1x4x1xbf16>
    %7 = vector.shape_cast %6 : vector<1x4x1xbf16> to vector<4x1xbf16>
    %c4_10 = arith.constant 4 : index
    %c383 = arith.constant 383 : index
    %8 = vector.load %arg9[%c4_10, %c383] : memref<36x384xbf16, #tpu.memory_space<vmem>>, vector<4x1xbf16>
    tpu.vector_store %arg9[%c4_10, %c383], %7 {strides = array<i32>} : memref<36x384xbf16, #tpu.memory_space<vmem>>, vector<4x1xbf16>,
    %c0_11 = arith.constant 0 : index
    %c0_12 = arith.constant 0 : index
    %c2 = arith.constant 2 : index
    %9 = vector.load %arg2[%c0_11, %c0_12, %c2] : memref<1x4x384xbf16, #tpu.memory_space<vmem>>, vector<1x4x382xbf16>
    %10 = vector.shape_cast %9 : vector<1x4x382xbf16> to vector<4x382xbf16>
    %c8 = arith.constant 8 : index
    %c0_13 = arith.constant 0 : index
    %11 = vector.load %arg9[%c8, %c0_13] : memref<36x384xbf16, #tpu.memory_space<vmem>>, vector<4x382xbf16>
    tpu.vector_store %arg9[%c8, %c0_13], %10 {strides = array<i32>} : memref<36x384xbf16, #tpu.memory_space<vmem>>, vector<4x382xbf16>,
    %c0_14 = arith.constant 0 : index
    %c0_15 = arith.constant 0 : index
    %c0_16 = arith.constant 0 : index
    %12 = vector.load %arg3[%c0_14, %c0_15, %c0_16] : memref<1x4x128xbf16, #tpu.memory_space<vmem>>, vector<1x4x2xbf16>
    %13 = vector.shape_cast %12 : vector<1x4x2xbf16> to vector<4x2xbf16>
    %c8_17 = arith.constant 8 : index
    %c382 = arith.constant 382 : index
    %14 = vector.load %arg9[%c8_17, %c382] : memref<36x384xbf16, #tpu.memory_space<vmem>>, vector<4x2xbf16>
    tpu.vector_store %arg9[%c8_17, %c382], %13 {strides = array<i32>} : memref<36x384xbf16, #tpu.memory_space<vmem>>, vector<4x2xbf16>,
    %c0_18 = arith.constant 0 : index
    %c0_19 = arith.constant 0 : index
    %c18 = arith.constant 18 : index
    %15 = vector.load %arg2[%c0_18, %c0_19, %c18] : memref<1x4x384xbf16, #tpu.memory_space<vmem>>, vector<1x4x366xbf16>
    %16 = vector.shape_cast %15 : vector<1x4x366xbf16> to vector<4x366xbf16>
    %c12 = arith.constant 12 : index
    %c0_20 = arith.constant 0 : index
    %17 = vector.load %arg9[%c12, %c0_20] : memref<36x384xbf16, #tpu.memory_space<vmem>>, vector<4x366xbf16>
    tpu.vector_store %arg9[%c12, %c0_20], %16 {strides = array<i32>} : memref<36x384xbf16, #tpu.memory_space<vmem>>, vector<4x366xbf16>,
    %c0_21 = arith.constant 0 : index
    %c0_22 = arith.constant 0 : index
    %c0_23 = arith.constant 0 : index
    %18 = vector.load %arg3[%c0_21, %c0_22, %c0_23] : memref<1x4x128xbf16, #tpu.memory_space<vmem>>, vector<1x4x18xbf16>
    %19 = vector.shape_cast %18 : vector<1x4x18xbf16> to vector<4x18xbf16>
    %c12_24 = arith.constant 12 : index
    %c366 = arith.constant 366 : index
    %20 = vector.load %arg9[%c12_24, %c366] : memref<36x384xbf16, #tpu.memory_space<vmem>>, vector<4x18xbf16>
    tpu.vector_store %arg9[%c12_24, %c366], %19 {strides = array<i32>} : memref<36x384xbf16, #tpu.memory_space<vmem>>, vector<4x18xbf16>,
    %c0_25 = arith.constant 0 : index
    %c0_26 = arith.constant 0 : index
    %c19 = arith.constant 19 : index
    %21 = vector.load %arg2[%c0_25, %c0_26, %c19] : memref<1x4x384xbf16, #tpu.memory_space<vmem>>, vector<1x4x365xbf16>
    %22 = vector.shape_cast %21 : vector<1x4x365xbf16> to vector<4x365xbf16>
    %c16 = arith.constant 16 : index
    %c0_27 = arith.constant 0 : index
    %23 = vector.load %arg9[%c16, %c0_27] : memref<36x384xbf16, #tpu.memory_space<vmem>>, vector<4x365xbf16>
    tpu.vector_store %arg9[%c16, %c0_27], %22 {strides = array<i32>} : memref<36x384xbf16, #tpu.memory_space<vmem>>, vector<4x365xbf16>,
    %c0_28 = arith.constant 0 : index
    %c0_29 = arith.constant 0 : index
    %c0_30 = arith.constant 0 : index
    %24 = vector.load %arg3[%c0_28, %c0_29, %c0_30] : memref<1x4x128xbf16, #tpu.memory_space<vmem>>, vector<1x4x19xbf16>
    %25 = vector.shape_cast %24 : vector<1x4x19xbf16> to vector<4x19xbf16>
    %c16_31 = arith.constant 16 : index
    %c365 = arith.constant 365 : index
    %26 = vector.load %arg9[%c16_31, %c365] : memref<36x384xbf16, #tpu.memory_space<vmem>>, vector<4x19xbf16>
    tpu.vector_store %arg9[%c16_31, %c365], %25 {strides = array<i32>} : memref<36x384xbf16, #tpu.memory_space<vmem>>, vector<4x19xbf16>,
    %c0_32 = arith.constant 0 : index
    %c0_33 = arith.constant 0 : index
    %c20 = arith.constant 20 : index
    %27 = vector.load %arg2[%c0_32, %c0_33, %c20] : memref<1x4x384xbf16, #tpu.memory_space<vmem>>, vector<1x4x364xbf16>
    %28 = vector.shape_cast %27 : vector<1x4x364xbf16> to vector<4x364xbf16>
    %c20_34 = arith.constant 20 : index
    %c0_35 = arith.constant 0 : index
    %29 = vector.load %arg9[%c20_34, %c0_35] : memref<36x384xbf16, #tpu.memory_space<vmem>>, vector<4x364xbf16>
    tpu.vector_store %arg9[%c20_34, %c0_35], %28 {strides = array<i32>} : memref<36x384xbf16, #tpu.memory_space<vmem>>, vector<4x364xbf16>,
    %c0_36 = arith.constant 0 : index
    %c0_37 = arith.constant 0 : index
    %c0_38 = arith.constant 0 : index
    %30 = vector.load %arg3[%c0_36, %c0_37, %c0_38] : memref<1x4x128xbf16, #tpu.memory_space<vmem>>, vector<1x4x20xbf16>
    %31 = vector.shape_cast %30 : vector<1x4x20xbf16> to vector<4x20xbf16>
    %c20_39 = arith.constant 20 : index
    %c364 = arith.constant 364 : index
    %32 = vector.load %arg9[%c20_39, %c364] : memref<36x384xbf16, #tpu.memory_space<vmem>>, vector<4x20xbf16>
    tpu.vector_store %arg9[%c20_39, %c364], %31 {strides = array<i32>} : memref<36x384xbf16, #tpu.memory_space<vmem>>, vector<4x20xbf16>,
    %c0_40 = arith.constant 0 : index
    %c0_41 = arith.constant 0 : index
    %c36 = arith.constant 36 : index
    %33 = vector.load %arg2[%c0_40, %c0_41, %c36] : memref<1x4x384xbf16, #tpu.memory_space<vmem>>, vector<1x4x348xbf16>
    %34 = vector.shape_cast %33 : vector<1x4x348xbf16> to vector<4x348xbf16>
    %c24 = arith.constant 24 : index
    %c0_42 = arith.constant 0 : index
    %35 = vector.load %arg9[%c24, %c0_42] : memref<36x384xbf16, #tpu.memory_space<vmem>>, vector<4x348xbf16>
    tpu.vector_store %arg9[%c24, %c0_42], %34 {strides = array<i32>} : memref<36x384xbf16, #tpu.memory_space<vmem>>, vector<4x348xbf16>,
    %c0_43 = arith.constant 0 : index
    %c0_44 = arith.constant 0 : index
    %c0_45 = arith.constant 0 : index
    %36 = vector.load %arg3[%c0_43, %c0_44, %c0_45] : memref<1x4x128xbf16, #tpu.memory_space<vmem>>, vector<1x4x36xbf16>
    %37 = vector.shape_cast %36 : vector<1x4x36xbf16> to vector<4x36xbf16>
    %c24_46 = arith.constant 24 : index
    %c348 = arith.constant 348 : index
    %38 = vector.load %arg9[%c24_46, %c348] : memref<36x384xbf16, #tpu.memory_space<vmem>>, vector<4x36xbf16>
    tpu.vector_store %arg9[%c24_46, %c348], %37 {strides = array<i32>} : memref<36x384xbf16, #tpu.memory_space<vmem>>, vector<4x36xbf16>,
    %c0_47 = arith.constant 0 : index
    %c0_48 = arith.constant 0 : index
    %c37 = arith.constant 37 : index
    %39 = vector.load %arg2[%c0_47, %c0_48, %c37] : memref<1x4x384xbf16, #tpu.memory_space<vmem>>, vector<1x4x347xbf16>
    %40 = vector.shape_cast %39 : vector<1x4x347xbf16> to vector<4x347xbf16>
    %c28 = arith.constant 28 : index
    %c0_49 = arith.constant 0 : index
    %41 = vector.load %arg9[%c28, %c0_49] : memref<36x384xbf16, #tpu.memory_space<vmem>>, vector<4x347xbf16>
    tpu.vector_store %arg9[%c28, %c0_49], %40 {strides = array<i32>} : memref<36x384xbf16, #tpu.memory_space<vmem>>, vector<4x347xbf16>,
    %c0_50 = arith.constant 0 : index
    %c0_51 = arith.constant 0 : index
    %c0_52 = arith.constant 0 : index
    %42 = vector.load %arg3[%c0_50, %c0_51, %c0_52] : memref<1x4x128xbf16, #tpu.memory_space<vmem>>, vector<1x4x37xbf16>
    %43 = vector.shape_cast %42 : vector<1x4x37xbf16> to vector<4x37xbf16>
    %c28_53 = arith.constant 28 : index
    %c347 = arith.constant 347 : index
    %44 = vector.load %arg9[%c28_53, %c347] : memref<36x384xbf16, #tpu.memory_space<vmem>>, vector<4x37xbf16>
    tpu.vector_store %arg9[%c28_53, %c347], %43 {strides = array<i32>} : memref<36x384xbf16, #tpu.memory_space<vmem>>, vector<4x37xbf16>,
    %c0_54 = arith.constant 0 : index
    %c0_55 = arith.constant 0 : index
    %c38 = arith.constant 38 : index
    %45 = vector.load %arg2[%c0_54, %c0_55, %c38] : memref<1x4x384xbf16, #tpu.memory_space<vmem>>, vector<1x4x346xbf16>
    %46 = vector.shape_cast %45 : vector<1x4x346xbf16> to vector<4x346xbf16>
    %c32 = arith.constant 32 : index
    %c0_56 = arith.constant 0 : index
    %47 = vector.load %arg9[%c32, %c0_56] : memref<36x384xbf16, #tpu.memory_space<vmem>>, vector<4x346xbf16>
    tpu.vector_store %arg9[%c32, %c0_56], %46 {strides = array<i32>} : memref<36x384xbf16, #tpu.memory_space<vmem>>, vector<4x346xbf16>,
    %c0_57 = arith.constant 0 : index
    %c0_58 = arith.constant 0 : index
    %c0_59 = arith.constant 0 : index
    %48 = vector.load %arg3[%c0_57, %c0_58, %c0_59] : memref<1x4x128xbf16, #tpu.memory_space<vmem>>, vector<1x4x38xbf16>
    %49 = vector.shape_cast %48 : vector<1x4x38xbf16> to vector<4x38xbf16>
    %c32_60 = arith.constant 32 : index
    %c346 = arith.constant 346 : index
    %50 = vector.load %arg9[%c32_60, %c346] : memref<36x384xbf16, #tpu.memory_space<vmem>>, vector<4x38xbf16>
    tpu.vector_store %arg9[%c32_60, %c346], %49 {strides = array<i32>} : memref<36x384xbf16, #tpu.memory_space<vmem>>, vector<4x38xbf16>,
    %c0_61 = arith.constant 0 : index
    %c0_62 = arith.constant 0 : index
    %51 = vector.load %arg4[%c0_61, %c0_62] : memref<4x36xbf16, #tpu.memory_space<vmem>>, vector<4x36xbf16>
    %c0_63 = arith.constant 0 : index
    %c0_64 = arith.constant 0 : index
    %52 = vector.load %arg9[%c0_63, %c0_64] : memref<36x384xbf16, #tpu.memory_space<vmem>>, vector<36x384xbf16>
    %cst = arith.constant dense<0.000000e+00> : vector<4x384xf32>
    %53 = tpu.matmul %51, %52, %cst {dimension_numbers = #tpu.dot_dimension_numbers<[1], [0], [0], [1], [0, 0, 1, 1], [], []>} : vector<4x36xbf16>, vector<36x384xbf16>, vector<4x384xf32> -> vector<4x384xf32>
    %c0_65 = arith.constant 0 : index
    %c0_66 = arith.constant 0 : index
    %54 = vector.load %arg5[%c0_65, %c0_66] : memref<4x1xf32, #tpu.memory_space<vmem>>, vector<4x1xf32>
    %55 = vector.broadcast %54 : vector<4x1xf32> to vector<4x384xf32>
    %56 = arith.addf %53, %55 : vector<4x384xf32>
    %cst_67 = arith.constant 0.000000e+00 : f32
    %57 = vector.broadcast %cst_67 : f32 to vector<4x384xf32>
    %58 = arith.maximumf %56, %57 : vector<4x384xf32>
    %59 = arith.truncf %58 : vector<4x384xf32> to vector<4x384xbf16>
    %c0_68 = arith.constant 0 : index
    %c0_69 = arith.constant 0 : index
    %60 = vector.load %arg6[%c0_68, %c0_69] : memref<15x4xbf16, #tpu.memory_space<vmem>>, vector<15x4xbf16>
    %cst_70 = arith.constant dense<0.000000e+00> : vector<15x384xf32>
    %61 = tpu.matmul %60, %59, %cst_70 {dimension_numbers = #tpu.dot_dimension_numbers<[1], [0], [0], [1], [0, 0, 1, 1], [], []>} : vector<15x4xbf16>, vector<4x384xbf16>, vector<15x384xf32> -> vector<15x384xf32>
    %c0_71 = arith.constant 0 : index
    %c0_72 = arith.constant 0 : index
    %62 = vector.load %arg7[%c0_71, %c0_72] : memref<15x1xf32, #tpu.memory_space<vmem>>, vector<15x1xf32>
    %63 = vector.broadcast %62 : vector<15x1xf32> to vector<15x384xf32>
    %64 = arith.addf %61, %63 : vector<15x384xf32>
    %c0_73 = arith.constant 0 : index
    %c0_74 = arith.constant 0 : index
    %c0_75 = arith.constant 0 : index
    %65 = vector.load %arg8[%c0_73, %c0_74, %c0_75] : memref<1x15x384xf32, #tpu.memory_space<vmem>>, vector<1x15x384xf32>
    %66 = vector.shape_cast %65 : vector<1x15x384xf32> to vector<15x384xf32>
    %67 = vector.shape_cast %64 : vector<15x384xf32> to vector<1x15x384xf32>
    tpu.vector_store %arg8[%c0_73, %c0_74, %c0_75], %67 {strides = array<i32>} : memref<1x15x384xf32, #tpu.memory_space<vmem>>, vector<1x15x384xf32>,
    return
  }
  func.func @transform_0(%arg0: i32, %arg1: i32) -> (i32, i32, i32) {
    %c0_i32 = arith.constant 0 : i32
    %c0_i32_0 = arith.constant 0 : i32
    return %arg0, %c0_i32, %arg1 : i32, i32, i32
  }
  func.func @transform_1(%arg0: i32, %arg1: i32) -> (i32, i32, i32) {
    %c1_i32 = arith.constant 1 : i32
    %0 = arith.addi %arg1, %c1_i32 : i32
    %c3_i32 = arith.constant 3 : i32
    %1 = arith.muli %0, %c3_i32 : i32
    %c0_i32 = arith.constant 0 : i32
    %c0_i32_0 = arith.constant 0 : i32
    return %arg0, %c0_i32, %1 : i32, i32, i32
  }
  func.func @transform_2(%arg0: i32, %arg1: i32) -> (i32, i32) {
    %c0_i32 = arith.constant 0 : i32
    %c0_i32_0 = arith.constant 0 : i32
    %c0_i32_1 = arith.constant 0 : i32
    return %c0_i32, %c0_i32_0 : i32, i32
  }
  func.func @transform_3(%arg0: i32, %arg1: i32) -> (i32, i32) {
    %c0_i32 = arith.constant 0 : i32
    %c0_i32_0 = arith.constant 0 : i32
    %c0_i32_1 = arith.constant 0 : i32
    return %c0_i32, %c0_i32_0 : i32, i32
  }
  func.func @transform_4(%arg0: i32, %arg1: i32) -> (i32, i32) {
    %c0_i32 = arith.constant 0 : i32
    %c0_i32_0 = arith.constant 0 : i32
    %c0_i32_1 = arith.constant 0 : i32
    return %c0_i32, %c0_i32_0 : i32, i32
  }
  func.func @transform_5(%arg0: i32, %arg1: i32) -> (i32, i32) {
    %c0_i32 = arith.constant 0 : i32
    %c0_i32_0 = arith.constant 0 : i32
    %c0_i32_1 = arith.constant 0 : i32
    return %c0_i32, %c0_i32_0 : i32, i32
  }
  func.func @transform_6(%arg0: i32, %arg1: i32) -> (i32, i32, i32) {
    %c0_i32 = arith.constant 0 : i32
    %c0_i32_0 = arith.constant 0 : i32
    return %arg0, %c0_i32, %arg1 : i32, i32, i32
  }
}

</mosaic_0001>

<llo_original>
// kernel: _rpn_head_level.1
$region0: #{_rpn_head_level.1}
  #allocation0 [shape = 'u32[]', space=smem, size = 0x4, offset = 0x4, fixed_abs, tag = 'smem constant byte address 0x4 - core index']
  #allocation1 [shape = 'u32[72,128]{1,0:T(1,128)}', space=vmem, size = 0x9000, scoped, tag = 'internal scratch']
  #allocation2 [shape = 'bf16[36,384]{1,0:T(8,128)(2,1)}', space=vmem, size = 0x7800, scoped, tag = 'scratch operand']
  %s0 = inlined_call_operand.vmem [shape: bf16[2,4,522], index: 0, kind: input, shape index: {}, may-alias: {0,1}]
  %s1 = inlined_call_operand.vmem [shape: bf16[2,4,522], index: 1, kind: input, shape index: {}, may-alias: {0,1}]
  %s2 = inlined_call_operand.vmem [shape: bf16[4,36], index: 2, kind: input, shape index: {}]
  %s3 = inlined_call_operand.vmem [shape: f32[4,1], index: 3, kind: input, shape index: {}]
  %s4 = inlined_call_operand.vmem [shape: bf16[15,4], index: 4, kind: input, shape index: {}]
  %s5 = inlined_call_operand.vmem [shape: f32[15,1], index: 5, kind: input, shape index: {}]
  %s6 = inlined_call_operand.vmem [shape: f32[2,15,384], index: 6, kind: output, shape index: {}]
  %s7 = sld [smem:[#allocation0]]
  $region57: #{_rpn_head_level.1} parent=0
    _
  %s9 = ssub.s32 1, %s7
  %s10 = scalar_select 0, %s9, %s7
  loop: start=0, step=1, limit=4
  $region2: #{_rpn_head_level.1} parent=0 // loop_pre_header
    _
  $region3: #{_rpn_head_level.1} parent=0 // loop_header
    %s12 = sphi 0, %s16
    %p13 = scmp.ge.s32.totalorder %s12, 4
    %s19 = sphi 0, %s31
    %s20 = sphi 0, %s27
    %s21 = sphi 0, %s19
    %s22 = sphi 0, %s20
    %s23 = sphi 0, %s21
    %s24 = sphi 0, %s22
    %s36 = sphi 0, %s38
    %s39 = sphi 0, %s36
    %s40 = sphi 0, %s39
    %s56 = sphi 0, %s40
    %s68 = sphi 0, %s70
    %s71 = sphi 0, %s68
    %s72 = sphi 0, %s71
    %s88 = sphi 0, %s72
    %s92 = sphi 0, %s92
    %s94 = sphi 0, %s92
    %s95 = sphi 0, %s94
    %s109 = sphi 0, %s95
    %s113 = sphi 0, %s113
    %s115 = sphi 0, %s113
    %s116 = sphi 0, %s115
    %s130 = sphi 0, %s116
    %s134 = sphi 0, %s134
    %s136 = sphi 0, %s134
    %s137 = sphi 0, %s136
    %s151 = sphi 0, %s137
    %s155 = sphi 0, %s155
    %s157 = sphi 0, %s155
    %s158 = sphi 0, %s157
    %s172 = sphi 0, %s158
    %s180 = sphi 0, %s182
    %s183 = sphi 0, %s180
    %s184 = sphi 0, %s183
    %s200 = sphi 0, %s184
  $region4: #{_rpn_head_level.1} parent=0 // loop_header_branch
    %15 = sbr.rel (%p13) target = $region8
  $region5: #{_rpn_head_level.1} parent=0 // loop_body
    %s17 = ssub.s32 %s12, 1
    %s18 = ssub.s32 %s12, 2
    %s25 = sadd.s32 1, %s20
    %p26 = scmp.ge.s32.totalorder %s25, 1
    %s27 = scalar_select %p26, 0, %s25
    %s28 = sadd.s32 1, %s19
    %s29 = scalar_select %p26, %s28, %s19
    %p30 = scmp.ge.s32.totalorder %s29, 2
    %s31 = scalar_select %p30, 0, %s29
    %s32 = ssub.s32 %s19, %s31
    %s33 = ssub.s32 %s20, %s27
    %s34 = sor.u32 %s32, %s33
    %p35 = scmp.eq.s32.totalorder %s34, 0
    %s37 = sadd.s32 %s36, 1
    %s38 = scalar_select %p35, %s36, %s37
    %p41 = pneg %p35
    %p42 = scmp.eq.s32.totalorder %s12, 1
    %p43 = por %p41, %p42
    %p44 = scmp.ne.s32.totalorder %s36, %s39
    %p45 = scmp.eq.s32.totalorder %s12, 0
    %p46 = por %p44, %p45
    %p47 = scmp.ne.s32.totalorder %s36, %s39
    %p48 = scmp.eq.s32.totalorder %s17, 1
    %p49 = por %p47, %p48
    %p50 = scmp.ne.s32.totalorder %s39, %s40
    %p51 = scmp.eq.s32.totalorder %s17, 0
    %p52 = por %p50, %p51
    %p53 = scmp.ne.s32.totalorder %s39, %s40
    %p54 = scmp.eq.s32.totalorder %s18, 1
    %p55 = por %p53, %p54
    %p57 = scmp.ne.s32.totalorder %s40, %s56
    %p58 = scmp.eq.s32.totalorder %s18, 0
    %p59 = por %p57, %p58
    %s60 = sadd.s32 %s20, 1
    %s61 = smul.u32 %s60, 3
    %s62 = sadd.s32 %s27, 1
    %s63 = smul.u32 %s62, 3
    %s64 = ssub.s32 %s19, %s31
    %s65 = ssub.s32 %s61, %s63
    %s66 = sor.u32 %s64, %s65
    %p67 = scmp.eq.s32.totalorder %s66, 0
    %s69 = sadd.s32 %s68, 1
    %s70 = scalar_select %p67, %s68, %s69
    %p73 = pneg %p67
    %p74 = scmp.eq.s32.totalorder %s12, 1
    %p75 = por %p73, %p74
    %p76 = scmp.ne.s32.totalorder %s68, %s71
    %p77 = scmp.eq.s32.totalorder %s12, 0
    %p78 = por %p76, %p77
    %p79 = scmp.ne.s32.totalorder %s68, %s71
    %p80 = scmp.eq.s32.totalorder %s17, 1
    %p81 = por %p79, %p80
    %p82 = scmp.ne.s32.totalorder %s71, %s72
    %p83 = scmp.eq.s32.totalorder %s17, 0
    %p84 = por %p82, %p83
    %p85 = scmp.ne.s32.totalorder %s71, %s72
    %p86 = scmp.eq.s32.totalorder %s18, 1
    %p87 = por %p85, %p86
    %p89 = scmp.ne.s32.totalorder %s72, %s88
    %p90 = scmp.eq.s32.totalorder %s18, 0
    %p91 = por %p89, %p90
    %s93 = sadd.s32 %s92, 1
    %p96 = scmp.eq.s32.totalorder %s12, 1
    %p97 = scmp.ne.s32.totalorder %s92, %s94
    %p98 = scmp.eq.s32.totalorder %s12, 0
    %p99 = por %p97, %p98
    %p100 = scmp.ne.s32.totalorder %s92, %s94
    %p101 = scmp.eq.s32.totalorder %s17, 1
    %p102 = por %p100, %p101
    %p103 = scmp.ne.s32.totalorder %s94, %s95
    %p104 = scmp.eq.s32.totalorder %s17, 0
    %p105 = por %p103, %p104
    %p106 = scmp.ne.s32.totalorder %s94, %s95
    %p107 = scmp.eq.s32.totalorder %s18, 1
    %p108 = por %p106, %p107
    %p110 = scmp.ne.s32.totalorder %s95, %s109
    %p111 = scmp.eq.s32.totalorder %s18, 0
    %p112 = por %p110, %p111
    %s114 = sadd.s32 %s113, 1
    %p117 = scmp.eq.s32.totalorder %s12, 1
    %p118 = scmp.ne.s32.totalorder %s113, %s115
    %p119 = scmp.eq.s32.totalorder %s12, 0
    %p120 = por %p118, %p119
    %p121 = scmp.ne.s32.totalorder %s113, %s115
    %p122 = scmp.eq.s32.totalorder %s17, 1
    %p123 = por %p121, %p122
    %p124 = scmp.ne.s32.totalorder %s115, %s116
    %p125 = scmp.eq.s32.totalorder %s17, 0
    %p126 = por %p124, %p125
    %p127 = scmp.ne.s32.totalorder %s115, %s116
    %p128 = scmp.eq.s32.totalorder %s18, 1
    %p129 = por %p127, %p128
    %p131 = scmp.ne.s32.totalorder %s116, %s130
    %p132 = scmp.eq.s32.totalorder %s18, 0
    %p133 = por %p131, %p132
    %s135 = sadd.s32 %s134, 1
    %p138 = scmp.eq.s32.totalorder %s12, 1
    %p139 = scmp.ne.s32.totalorder %s134, %s136
    %p140 = scmp.eq.s32.totalorder %s12, 0
    %p141 = por %p139, %p140
    %p142 = scmp.ne.s32.totalorder %s134, %s136
    %p143 = scmp.eq.s32.totalorder %s17, 1
    %p144 = por %p142, %p143
    %p145 = scmp.ne.s32.totalorder %s136, %s137
    %p146 = scmp.eq.s32.totalorder %s17, 0
    %p147 = por %p145, %p146
    %p148 = scmp.ne.s32.totalorder %s136, %s137
    %p149 = scmp.eq.s32.totalorder %s18, 1
    %p150 = por %p148, %p149
    %p152 = scmp.ne.s32.totalorder %s137, %s151
    %p153 = scmp.eq.s32.totalorder %s18, 0
    %p154 = por %p152, %p153
    %s156 = sadd.s32 %s155, 1
    %p159 = scmp.eq.s32.totalorder %s12, 1
    %p160 = scmp.ne.s32.totalorder %s155, %s157
    %p161 = scmp.eq.s32.totalorder %s12, 0
    %p162 = por %p160, %p161
    %p163 = scmp.ne.s32.totalorder %s155, %s157
    %p164 = scmp.eq.s32.totalorder %s17, 1
    %p165 = por %p163, %p164
    %p166 = scmp.ne.s32.totalorder %s157, %s158
    %p167 = scmp.eq.s32.totalorder %s17, 0
    %p168 = por %p166, %p167
    %p169 = scmp.ne.s32.totalorder %s157, %s158
    %p170 = scmp.eq.s32.totalorder %s18, 1
    %p171 = por %p169, %p170
    %p173 = scmp.ne.s32.totalorder %s158, %s172
    %p174 = scmp.eq.s32.totalorder %s18, 0
    %p175 = por %p173, %p174
    %s176 = ssub.s32 %s19, %s31
    %s177 = ssub.s32 %s20, %s27
    %s178 = sor.u32 %s176, %s177
    %p179 = scmp.eq.s32.totalorder %s178, 0
    %s181 = sadd.s32 %s180, 1
    %s182 = scalar_select %p179, %s180, %s181
    %p185 = pneg %p179
    %p186 = scmp.eq.s32.totalorder %s12, 1
    %p187 = por %p185, %p186
    %p188 = scmp.ne.s32.totalorder %s180, %s183
    %p189 = scmp.eq.s32.totalorder %s12, 0
    %p190 = por %p188, %p189
    %p191 = scmp.ne.s32.totalorder %s180, %s183
    %p192 = scmp.eq.s32.totalorder %s17, 1
    %p193 = por %p191, %p192
    %p194 = scmp.ne.s32.totalorder %s183, %s184
    %p195 = scmp.eq.s32.totalorder %s17, 0
    %p196 = por %p194, %p195
    %p197 = scmp.ne.s32.totalorder %s183, %s184
    %p198 = scmp.eq.s32.totalorder %s18, 1
    %p199 = por %p197, %p198
    %p201 = scmp.ne.s32.totalorder %s184, %s200
    %p202 = scmp.eq.s32.totalorder %s18, 0
    %p203 = por %p201, %p202
    %p204 = scmp.le.s32.totalorder 1, %s12
    %p205 = scmp.lt.s32.totalorder %s12, 3
    %p206 = pnand %p204, %p205
    %p207 = pneg %p206
    // Predicated region
    $region9: #{_rpn_head_level.1} parent=5 // pred_check
      _
    $region10: #{_rpn_head_level.1} parent=5 // pred_check_branch
      %209 = sbr.rel (%p206) target = $region12
    $region11: #{_rpn_head_level.1} parent=5 // pred_region
      %s210 = ssub.s32 %s12, 1
      // Predicated region
      $region13: #{_rpn_head_level.1} parent=11 // pred_check
        %p211 = pneg %p105
      $region14: #{_rpn_head_level.1} parent=11 // pred_check_branch
        %213 = sbr.rel (%p211) target = $region16
      $region15: #{_rpn_head_level.1} parent=11 // pred_region
        _
      $region16: #{_rpn_head_level.1} parent=11 // pred_fallthru
        _
      // Predicated region
      $region17: #{_rpn_head_level.1} parent=11 // pred_check
        %p214 = pneg %p126
      $region18: #{_rpn_head_level.1} parent=11 // pred_check_branch
        %216 = sbr.rel (%p214) target = $region20
      $region19: #{_rpn_head_level.1} parent=11 // pred_region
        _
      $region20: #{_rpn_head_level.1} parent=11 // pred_fallthru
        _
      // Predicated region
      $region21: #{_rpn_head_level.1} parent=11 // pred_check
        %p217 = pneg %p147
      $region22: #{_rpn_head_level.1} parent=11 // pred_check_branch
        %219 = sbr.rel (%p217) target = $region24
      $region23: #{_rpn_head_level.1} parent=11 // pred_region
        _
      $region24: #{_rpn_head_level.1} parent=11 // pred_fallthru
        _
      // Predicated region
      $region25: #{_rpn_head_level.1} parent=11 // pred_check
        %p220 = pneg %p168
      $region26: #{_rpn_head_level.1} parent=11 // pred_check_branch
        %222 = sbr.rel (%p220) target = $region28
      $region27: #{_rpn_head_level.1} parent=11 // pred_region
        _
      $region28: #{_rpn_head_level.1} parent=11 // pred_fallthru
        _
    $region12: #{_rpn_head_level.1} parent=5 // pred_fallthru
      _
    %p223 = scmp.lt.s32.totalorder %s12, 2
    // Predicated region
    $region29: #{_rpn_head_level.1} parent=5 // pred_check
      %p224 = pneg %p223
    $region30: #{_rpn_head_level.1} parent=5 // pred_check_branch
      %226 = sbr.rel (%p224) target = $region32
    $region31: #{_rpn_head_level.1} parent=5 // pred_region
      // Predicated region
      $region33: #{_rpn_head_level.1} parent=31 // pred_check
        %p227 = pneg %p46
      $region34: #{_rpn_head_level.1} parent=31 // pred_check_branch
        %229 = sbr.rel (%p227) target = $region36
      $region35: #{_rpn_head_level.1} parent=31 // pred_region
        %s230 = smul.u32 3, %s20
        %s231 = ssub.s32 5, %s230
        %p232 = scmp.lt.s32.totalorder %s231, 3
        %s233 = scalar_select %p232, %s231, 3
        %s234 = smul.u32 2, %s233
        %p235 = scmp.lt.s32.totalorder %s19, 1
        %s236 = scalar_select %p235, %s19, 1
        %p237 = scmp.lt.s32.totalorder %s230, 4
        %s238 = scalar_select %p237, %s230, 4
        %s239 = smul.addr %s236, 5
        %s240 = sadd.s32 %s238, %s239
        %s241 = smul.addr %s240, 2
        %s242 = scalar_lea.vmem %s0, %s241
        %s243 = smul.u32 3, %s20
        %s244 = ssub.s32 5, %s243
        %p245 = scmp.lt.s32.totalorder %s244, 3
        %s246 = scalar_select %p245, %s244, 3
        %s247 = smul.u32 2, %s246
      $region36: #{_rpn_head_level.1} parent=31 // pred_fallthru
        _
      // Predicated region
      $region37: #{_rpn_head_level.1} parent=31 // pred_check
        %p248 = pneg %p78
      $region38: #{_rpn_head_level.1} parent=31 // pred_check_branch
        %250 = sbr.rel (%p248) target = $region40
      $region39: #{_rpn_head_level.1} parent=31 // pred_region
        %s251 = sadd.s32 %s20, 1
        %s252 = smul.u32 %s251, 3
        %p253 = scmp.lt.s32.totalorder %s19, 1
        %s254 = scalar_select %p253, %s19, 1
        %p255 = scmp.lt.s32.totalorder %s252, 4
        %s256 = scalar_select %p255, %s252, 4
        %s257 = smul.addr %s254, 5
        %s258 = sadd.s32 %s256, %s257
        %s259 = smul.addr %s258, 2
        %s260 = scalar_lea.vmem %s1, %s259
        %s261 = sadd.s32 %s20, 1
        %s262 = smul.u32 %s261, 3
      $region40: #{_rpn_head_level.1} parent=31 // pred_fallthru
        _
    $region32: #{_rpn_head_level.1} parent=5 // pred_fallthru
      _
    %p263 = scmp.le.s32.totalorder 1, %s12
    %p264 = scmp.lt.s32.totalorder %s12, 3
    %p265 = pnand %p263, %p264
    %p266 = pneg %p265
    // Predicated region
    $region41: #{_rpn_head_level.1} parent=5 // pred_check
      _
    $region42: #{_rpn_head_level.1} parent=5 // pred_check_branch
      %268 = sbr.rel (%p265) target = $region44
    $region43: #{_rpn_head_level.1} parent=5 // pred_region
      %s269 = ssub.s32 %s12, 1
      %s270 = smul.u32 3, %s22
      %s271 = ssub.s32 5, %s270
      %p272 = scmp.lt.s32.totalorder %s271, 3
      %s273 = scalar_select %p272, %s271, 3
      %s274 = smul.u32 2, %s273
      %p275 = scmp.lt.s32.totalorder %s21, 1
      %s276 = scalar_select %p275, %s21, 1
      %p277 = scmp.lt.s32.totalorder %s270, 4
      %s278 = scalar_select %p277, %s270, 4
      %s279 = smul.addr %s276, 5
      %s280 = sadd.s32 %s278, %s279
      %s281 = smul.addr %s280, 2
      %s282 = scalar_lea.vmem %s0, %s281
      %p283 = pneg %p52
      %p284 = pneg %p49
      %s285 = sadd.s32 %s22, 1
      %s286 = smul.u32 %s285, 3
      %p287 = scmp.lt.s32.totalorder %s21, 1
      %s288 = scalar_select %p287, %s21, 1
      %p289 = scmp.lt.s32.totalorder %s286, 4
      %s290 = scalar_select %p289, %s286, 4
      %s291 = smul.addr %s288, 5
      %s292 = sadd.s32 %s290, %s291
      %s293 = smul.addr %s292, 2
      %s294 = scalar_lea.vmem %s1, %s293
      %p295 = pneg %p84
      %p296 = pneg %p81
      %p297 = pneg %p105
      %p298 = pneg %p102
      %p299 = pneg %p126
      %p300 = pneg %p123
      %p301 = pneg %p147
      %p302 = pneg %p144
      %p303 = pneg %p168
      %p304 = pneg %p165
      %p305 = pneg %p196
      %p306 = pneg %p193
      %s307 = smul.u32 3, %s22
      %p308 = scmp.lt.s32.totalorder %s21, 1
      %s309 = scalar_select %p308, %s21, 1
      %p310 = scmp.lt.s32.totalorder %s307, 2
      %s311 = scalar_select %p310, %s307, 2
      %s312 = smul.addr %s309, 6
      %s313 = sadd.s32 %s311, %s312
      %s314 = smul.addr %s313, 8
      %s315 = scalar_lea.vmem %s6, %s314
      %s316 = smul.u32 3, %s22
      %s317 = ssub.s32 5, %s316
      %p318 = scmp.lt.s32.totalorder %s317, 3
      %s319 = scalar_select %p318, %s317, 3
      %s320 = smul.u32 2, %s319
      %p321 = scmp.lt.s32.totalorder %s21, 1
      %s322 = scalar_select %p321, %s21, 1
      %p323 = scmp.lt.s32.totalorder %s316, 4
      %s324 = scalar_select %p323, %s316, 4
      %s325 = smul.addr %s322, 5
      %s326 = sadd.s32 %s324, %s325
      %s327 = smul.addr %s326, 2
      %s328 = scalar_lea.vmem %s0, %s327
      %s329 = smul.u32 3, %s22
      %s330 = ssub.s32 5, %s329
      %p331 = scmp.lt.s32.totalorder %s330, 3
      %s332 = scalar_select %p331, %s330, 3
      %s333 = smul.u32 2, %s332
      %s334 = sadd.s32 %s22, 1
      %s335 = smul.u32 %s334, 3
      %p336 = scmp.lt.s32.totalorder %s21, 1
      %s337 = scalar_select %p336, %s21, 1
      %p338 = scmp.lt.s32.totalorder %s335, 4
      %s339 = scalar_select %p338, %s335, 4
      %s340 = smul.addr %s337, 5
      %s341 = sadd.s32 %s339, %s340
      %s342 = smul.addr %s341, 2
      %s343 = scalar_lea.vmem %s1, %s342
      %s344 = sadd.s32 %s22, 1
      %s345 = smul.u32 %s344, 3
      %s346 = smul.u32 3, %s22
      %p347 = scmp.lt.s32.totalorder %s21, 1
      %s348 = scalar_select %p347, %s21, 1
      %p349 = scmp.lt.s32.totalorder %s346, 2
      %s350 = scalar_select %p349, %s346, 2
      %s351 = smul.addr %s348, 6
      %s352 = sadd.s32 %s350, %s351
      %s353 = smul.addr %s352, 8
      %s354 = scalar_lea.vmem %s6, %s353
      %s355 = smul.u32 3, %s22
      %v357 = vld [vmem:[%s328] sm:$0x3f]
      %359 = vst [vmem:[#allocation1] ss:$2 sm:$0xff] %v357
      %v360 = vld.sshfl [vmem:[#allocation1] sm:$0xff pattern:$0x75643120]
      %v361 = vld.sshfl [vmem:[#allocation1 + $0x8] sm:$0xff pattern:$0x75643120]
      %364 = vst [vmem:[#allocation2] sm:$0x33] %v360
      %365 = vst [vmem:[#allocation2 + $0x8] sm:$0x3] %v361
      %v366 = vld [vmem:[%s328] sm:$0x3f]
      %s368 = scalar_lea.vmem [#allocation1], 1
      %369 = vst [vmem:[%s368] ss:$2 sm:$0xff] %v366
      %v370 = vld.sshfl [vmem:[#allocation1] sm:$0xff pattern:$0x75643120]
      %v372 = vld.sshfl [vmem:[#allocation1 + $0x8] sm:$0xff pattern:$0x75643120]
      %374 = vrot.lane.b32.xlu0 %v370, 127
      %v375 = vpop.permute.xlu0 %374
      %376 = vrot.lane.b32.xlu0 %v372, 127
      %v377 = vpop.permute.xlu0 %376
      %v378 = vrot.slane %v375, 4
      %v379 = vrot.slane %v377, 4
      %vm380 = vcmask 1043456
      %v381 = vsel %vm380, %v378, %v379
      %vm382 = vcmask 1039360
      %v383 = vsel %vm382, %v375, %v381
      %386 = vst [vmem:[#allocation2] sm:$0xcc] %v383
      %vm387 = vcmask 1035266
      %388 = vst.msk [vmem:[#allocation2 + $0x8] sm:$0xc] %vm387, %v377
      %v389 = vld [vmem:[%s343] sm:$0x3]
      %s391 = scalar_lea.vmem [#allocation1], 1
      %392 = vst [vmem:[%s391] ss:$2 sm:$0xff] %v389
      %v393 = vld.sshfl [vmem:[#allocation1] sm:$0xff pattern:$0x75643120]
      %395 = vrot.lane.b32.xlu0 %v393, 127
      %v396 = vpop.permute.xlu0 %395
      %vm398 = vcmask 1044474
      %399 = vst.msk [vmem:[#allocation2 + $0x8] sm:$0xc] %vm398, %v396
      %v400 = vld [vmem:[%s328] sm:$0x3f]
      %402 = vst [vmem:[#allocation1] ss:$2 sm:$0xff] %v400
      %v403 = vld.sshfl [vmem:[#allocation1] sm:$0xff pattern:$0x75643120]
      %v405 = vld.sshfl [vmem:[#allocation1 + $0x8] sm:$0xff pattern:$0x75643120]
      %407 = vrot.lane.b32.xlu0 %v403, 126
      %v408 = vpop.permute.xlu0 %407
      %409 = vrot.lane.b32.xlu0 %v405, 126
      %v410 = vpop.permute.xlu0 %409
      %v411 = vrot.slane %v408, 4
      %v412 = vrot.slane %v410, 4
      %v413 = vsel %vm380, %v411, %v412
      %vm414 = vcmask 1031168
      %v415 = vsel %vm414, %v408, %v413
      %418 = vst [vmem:[#allocation2 + $0xc] sm:$0x33] %v415
      %vm419 = vcmask 1025024
      %420 = vst.msk [vmem:[#allocation2 + $0x14] sm:$0x3] %vm419, %v410
      %v421 = vld [vmem:[%s343] sm:$0x3]
      %423 = vst [vmem:[#allocation1] ss:$2 sm:$0xff] %v421
      %v424 = vld.sshfl [vmem:[#allocation1] sm:$0xff pattern:$0x75643120]
      %426 = vrot.lane.b32.xlu0 %v424, 126
      %v427 = vpop.permute.xlu0 %426
      %vm429 = vcmask 1042416
      %430 = vst.msk [vmem:[#allocation2 + $0x14] sm:$0x3] %vm429, %v427
      %v431 = vld [vmem:[%s328] sm:$0x3f]
      %s433 = scalar_lea.vmem [#allocation1], 1
      %434 = vst [vmem:[%s433] ss:$2 sm:$0xff] %v431
      %v435 = vld.sshfl [vmem:[#allocation1] sm:$0xff pattern:$0x75643120]
      %v437 = vld.sshfl [vmem:[#allocation1 + $0x8] sm:$0xff pattern:$0x75643120]
      %439 = vrot.lane.b32.xlu0 %v435, 110
      %v440 = vpop.permute.xlu0 %439
      %441 = vrot.lane.b32.xlu0 %v437, 110
      %v442 = vpop.permute.xlu0 %441
      %v443 = vrot.slane %v440, 4
      %v444 = vrot.slane %v442, 4
      %v445 = vsel %vm380, %v443, %v444
      %vm446 = vcmask 900096
      %v447 = vsel %vm446, %v440, %v445
      %450 = vst [vmem:[#allocation2 + $0xc] sm:$0xcc] %v447
      %vm451 = vcmask 896002
      %452 = vst.msk [vmem:[#allocation2 + $0x14] sm:$0xc] %vm451, %v442
      %v453 = vld [vmem:[%s343] sm:$0x3]
      %s455 = scalar_lea.vmem [#allocation1], 1
      %456 = vst [vmem:[%s455] ss:$2 sm:$0xff] %v453
      %v457 = vld.sshfl [vmem:[#allocation1] sm:$0xff pattern:$0x75643120]
      %459 = vrot.lane.b32.xlu0 %v457, 110
      %v460 = vpop.permute.xlu0 %459
      %vm462 = vcmask 1044338
      %463 = vst.msk [vmem:[#allocation2 + $0x14] sm:$0xc] %vm462, %v460
      %v464 = vld [vmem:[%s328] sm:$0x3f]
      %466 = vst [vmem:[#allocation1] ss:$2 sm:$0xff] %v464
      %v467 = vld.sshfl [vmem:[#allocation1] sm:$0xff pattern:$0x75643120]
      %v469 = vld.sshfl [vmem:[#allocation1 + $0x8] sm:$0xff pattern:$0x75643120]
      %471 = vrot.lane.b32.xlu0 %v467, 109
      %v472 = vpop.permute.xlu0 %471
      %473 = vrot.lane.b32.xlu0 %v469, 109
      %v474 = vpop.permute.xlu0 %473
      %v475 = vrot.slane %v472, 4
      %v476 = vrot.slane %v474, 4
      %v477 = vsel %vm380, %v475, %v476
      %vm478 = vcmask 891904
      %v479 = vsel %vm478, %v472, %v477
      %482 = vst [vmem:[#allocation2 + $0x18] sm:$0x33] %v479
      %vm483 = vcmask 885760
      %484 = vst.msk [vmem:[#allocation2 + $0x20] sm:$0x3] %vm483, %v474
      %v485 = vld [vmem:[%s343] sm:$0x3]
      %487 = vst [vmem:[#allocation1] ss:$2 sm:$0xff] %v485
      %v488 = vld.sshfl [vmem:[#allocation1] sm:$0xff pattern:$0x75643120]
      %490 = vrot.lane.b32.xlu0 %v488, 109
      %v491 = vpop.permute.xlu0 %490
      %vm493 = vcmask 1042280
      %494 = vst.msk [vmem:[#allocation2 + $0x20] sm:$0x3] %vm493, %v491
      %v495 = vld [vmem:[%s328] sm:$0x3f]
      %s497 = scalar_lea.vmem [#allocation1], 1
      %498 = vst [vmem:[%s497] ss:$2 sm:$0xff] %v495
      %v499 = vld.sshfl [vmem:[#allocation1] sm:$0xff pattern:$0x75643120]
      %v501 = vld.sshfl [vmem:[#allocation1 + $0x8] sm:$0xff pattern:$0x75643120]
      %503 = vrot.lane.b32.xlu0 %v499, 108
      %v504 = vpop.permute.xlu0 %503
      %505 = vrot.lane.b32.xlu0 %v501, 108
      %v506 = vpop.permute.xlu0 %505
      %v507 = vrot.slane %v504, 4
      %v508 = vrot.slane %v506, 4
      %v509 = vsel %vm380, %v507, %v508
      %vm510 = vcmask 883712
      %v511 = vsel %vm510, %v504, %v509
      %514 = vst [vmem:[#allocation2 + $0x18] sm:$0xcc] %v511
      %vm515 = vcmask 879618
      %516 = vst.msk [vmem:[#allocation2 + $0x20] sm:$0xc] %vm515, %v506
      %v517 = vld [vmem:[%s343] sm:$0x3]
      %s519 = scalar_lea.vmem [#allocation1], 1
      %520 = vst [vmem:[%s519] ss:$2 sm:$0xff] %v517
      %v521 = vld.sshfl [vmem:[#allocation1] sm:$0xff pattern:$0x75643120]
      %523 = vrot.lane.b32.xlu0 %v521, 108
      %v524 = vpop.permute.xlu0 %523
      %vm526 = vcmask 1044322
      %527 = vst.msk [vmem:[#allocation2 + $0x20] sm:$0xc] %vm526, %v524
      %v528 = vld [vmem:[%s328] sm:$0x3f]
      %530 = vst [vmem:[#allocation1] ss:$2 sm:$0xff] %v528
      %v531 = vld.sshfl [vmem:[#allocation1] sm:$0xff pattern:$0x75643120]
      %v533 = vld.sshfl [vmem:[#allocation1 + $0x8] sm:$0xff pattern:$0x75643120]
      %535 = vrot.lane.b32.xlu0 %v531, 92
      %v536 = vpop.permute.xlu0 %535
      %537 = vrot.lane.b32.xlu0 %v533, 92
      %v538 = vpop.permute.xlu0 %537
      %v539 = vrot.slane %v536, 4
      %v540 = vrot.slane %v538, 4
      %v541 = vsel %vm380, %v539, %v540
      %vm542 = vcmask 752640
      %v543 = vsel %vm542, %v536, %v541
      %546 = vst [vmem:[#allocation2 + $0x24] sm:$0x33] %v543
      %vm547 = vcmask 746496
      %548 = vst.msk [vmem:[#allocation2 + $0x2c] sm:$0x3] %vm547, %v538
      %v549 = vld [vmem:[%s343] sm:$0x3]
      %551 = vst [vmem:[#allocation1] ss:$2 sm:$0xff] %v549
      %v552 = vld.sshfl [vmem:[#allocation1] sm:$0xff pattern:$0x75643120]
      %554 = vrot.lane.b32.xlu0 %v552, 92
      %v555 = vpop.permute.xlu0 %554
      %vm557 = vcmask 1042144
      %558 = vst.msk [vmem:[#allocation2 + $0x2c] sm:$0x3] %vm557, %v555
      %v559 = vld [vmem:[%s328] sm:$0x3f]
      %s561 = scalar_lea.vmem [#allocation1], 1
      %562 = vst [vmem:[%s561] ss:$2 sm:$0xff] %v559
      %v563 = vld.sshfl [vmem:[#allocation1] sm:$0xff pattern:$0x75643120]
      %v565 = vld.sshfl [vmem:[#allocation1 + $0x8] sm:$0xff pattern:$0x75643120]
      %567 = vrot.lane.b32.xlu0 %v563, 91
      %v568 = vpop.permute.xlu0 %567
      %569 = vrot.lane.b32.xlu0 %v565, 91
      %v570 = vpop.permute.xlu0 %569
      %v571 = vrot.slane %v568, 4
      %v572 = vrot.slane %v570, 4
      %v573 = vsel %vm380, %v571, %v572
      %vm574 = vcmask 744448
      %v575 = vsel %vm574, %v568, %v573
      %578 = vst [vmem:[#allocation2 + $0x24] sm:$0xcc] %v575
      %vm579 = vcmask 740354
      %580 = vst.msk [vmem:[#allocation2 + $0x2c] sm:$0xc] %vm579, %v570
      %v581 = vld [vmem:[%s343] sm:$0x3]
      %s583 = scalar_lea.vmem [#allocation1], 1
      %584 = vst [vmem:[%s583] ss:$2 sm:$0xff] %v581
      %v585 = vld.sshfl [vmem:[#allocation1] sm:$0xff pattern:$0x75643120]
      %587 = vrot.lane.b32.xlu0 %v585, 91
      %v588 = vpop.permute.xlu0 %587
      %vm590 = vcmask 1044186
      %591 = vst.msk [vmem:[#allocation2 + $0x2c] sm:$0xc] %vm590, %v588
      %v592 = vld [vmem:[%s328] sm:$0x3f]
      %594 = vst [vmem:[#allocation1] ss:$2 sm:$0xff] %v592
      %v595 = vld.sshfl [vmem:[#allocation1] sm:$0xff pattern:$0x75643120]
      %v597 = vld.sshfl [vmem:[#allocation1 + $0x8] sm:$0xff pattern:$0x75643120]
      %599 = vrot.lane.b32.xlu0 %v595, 90
      %v600 = vpop.permute.xlu0 %599
      %601 = vrot.lane.b32.xlu0 %v597, 90
      %v602 = vpop.permute.xlu0 %601
      %v603 = vrot.slane %v600, 4
      %v604 = vrot.slane %v602, 4
      %v605 = vsel %vm380, %v603, %v604
      %vm606 = vcmask 736256
      %v607 = vsel %vm606, %v600, %v605
      %610 = vst [vmem:[#allocation2 + $0x30] sm:$0x33] %v607
      %vm611 = vcmask 730112
      %612 = vst.msk [vmem:[#allocation2 + $0x38] sm:$0x3] %vm611, %v602
      %v613 = vld [vmem:[%s343] sm:$0x3]
      %615 = vst [vmem:[#allocation1] ss:$2 sm:$0xff] %v613
      %v616 = vld.sshfl [vmem:[#allocation1] sm:$0xff pattern:$0x75643120]
      %618 = vrot.lane.b32.xlu0 %v616, 90
      %v619 = vpop.permute.xlu0 %618
      %vm621 = vcmask 1042128
      %622 = vst.msk [vmem:[#allocation2 + $0x38] sm:$0x3] %vm621, %v619
      %v623 = vld [vmem:[%s2] sm:$0x3]
      %v624 = vld [vmem:[#allocation2] sm:$0xff]
      %v625 = vld [vmem:[#allocation2 + $0x8] sm:$0xf]
      %v626 = vld [vmem:[#allocation2 + $0xc] sm:$0xff]
      %v627 = vld [vmem:[#allocation2 + $0x14] sm:$0xf]
      %v628 = vld [vmem:[#allocation2 + $0x18] sm:$0xff]
      %v629 = vld [vmem:[#allocation2 + $0x20] sm:$0xf]
      %v630 = vld [vmem:[#allocation2 + $0x24] sm:$0xff]
      %v631 = vld [vmem:[#allocation2 + $0x2c] sm:$0xf]
      %v632 = vld [vmem:[#allocation2 + $0x30] sm:$0x33]
      %v633 = vld [vmem:[#allocation2 + $0x38] sm:$0x3]
      %v634 = vld [vmem:[%s3] sm:$0xf]
      %636 = vset.pattern.permute.xlu0 0
      %637 = vperm.xlu0 %636, %v634
      %v638 = vpop.permute.xlu0 %637
      %v650 = vunpack.c.l.b16 %v624
      %v651 = vunpack.c.h.b16 %v624
      %v652 = vunpack.c.l.b16 %v625
      %v653 = vunpack.c.l.b16 %v626
      %v654 = vunpack.c.h.b16 %v626
      %v655 = vunpack.c.l.b16 %v627
      %v656 = vunpack.c.l.b16 %v628
      %v657 = vunpack.c.h.b16 %v628
      %v658 = vunpack.c.l.b16 %v629
      %v659 = vunpack.c.l.b16 %v630
      %v660 = vunpack.c.h.b16 %v630
      %v661 = vunpack.c.l.b16 %v631
      %v662 = vunpack.c.l.b16 %v632
      %v663 = vunpack.c.h.b16 %v632
      %v664 = vunpack.c.l.b16 %v633
      %v665 = vpack.c.b16 %v653, %v650
      %v666 = vpack.c.b16 %v654, %v651
      %v667 = vpack.c.b16 %v655, %v652
      %v668 = vpack.c.b16 %v659, %v656
      %v669 = vpack.c.b16 %v660, %v657
      %v670 = vpack.c.b16 %v661, %v658
      %v671 = vpack.c.b16 %v662, %v662
      %v672 = vpack.c.b16 %v663, %v663
      %v673 = vpack.c.b16 %v664, %v664
      %vm680 = vcmask 293888
      %v682 = vsel %vm680, %v623, 0
      %vm684 = vcmask 1041408
      %v686 = vsel %vm684, %v671, 0
      %v689 = vsel %vm684, %v672, 0
      %v692 = vsel %vm684, %v673, 0
      %694 = vmatpush.bf16.msra.mxu0 0
      %695 = vmatpush.bf16.msra.mxu0 0
      %696 = vmatpush.bf16.msra.mxu0 0
      %697 = vmatpush.bf16.msra.mxu0 0
      %698 = vmatpush.bf16.msra.mxu0 0
      %699 = vmatpush.bf16.msra.mxu0 %v686
      %700 = vmatpush.bf16.msra.mxu0 %v668
      %701 = vmatpush.bf16.msra.mxu0 %v665
      %702 = vmatmul.bf16.gmra.mxu0 %v682
      %v703 = vpop.f32.mrf.mxu0
      %v704 = vadd.f32 %v638, %v703
      %v705 = vpop.f32.mrf.mxu0
      %706 = vdwg.mxu0
      %707 = vmatpush.bf16.msra.mxu0 0
      %708 = vmatpush.bf16.msra.mxu0 0
      %709 = vmatpush.bf16.msra.mxu0 0
      %710 = vmatpush.bf16.msra.mxu0 0
      %711 = vmatpush.bf16.msra.mxu0 0
      %712 = vmatpush.bf16.msra.mxu0 %v689
      %713 = vmatpush.bf16.msra.mxu0 %v669
      %714 = vmatpush.bf16.msra.mxu0 %v666
      %715 = vmatmul.bf16.gmra.mxu0 %v682
      %v716 = vpop.f32.mrf.mxu0
      %v717 = vadd.f32 %v638, %v716
      %v718 = vpop.f32.mrf.mxu0
      %719 = vdwg.mxu0
      %720 = vmatpush.bf16.msra.mxu0 0
      %721 = vmatpush.bf16.msra.mxu0 0
      %722 = vmatpush.bf16.msra.mxu0 0
      %723 = vmatpush.bf16.msra.mxu0 0
      %724 = vmatpush.bf16.msra.mxu0 0
      %725 = vmatpush.bf16.msra.mxu0 %v692
      %726 = vmatpush.bf16.msra.mxu0 %v670
      %727 = vmatpush.bf16.msra.mxu0 %v667
      %728 = vmatmul.bf16.gmra.mxu0 %v682
      %v729 = vpop.f32.mrf.mxu0
      %v730 = vadd.f32 %v638, %v729
      %v731 = vpop.f32.mrf.mxu0
      %732 = vdwg.mxu0
      %v733 = vmax.f32 %v704, 0.0
      %v734 = vmax.f32 %v717, 0.0
      %v735 = vmax.f32 %v730, 0.0
      %v736 = vpack.c.bf16 %v733, %v733
      %v737 = vpack.c.bf16 %v734, %v734
      %v738 = vpack.c.bf16 %v735, %v735
      %v739 = vld [vmem:[%s4] sm:$0xf]
      %v740 = vld [vmem:[%s4 + $0x4] sm:$0xf]
      %v741 = vld [vmem:[%s5] sm:$0xff]
      %v742 = vld [vmem:[%s5 + $0x8] sm:$0x7f]
      %744 = vset.pattern.permute.xlu0 0
      %745 = vperm.xlu0 %744, %v741
      %v746 = vpop.permute.xlu0 %745
      %749 = vset.pattern.permute.xlu0 0
      %750 = vperm.xlu0 %749, %v742
      %v751 = vpop.permute.xlu0 %750
      %v755 = vunpack.c.l.b16 %v739
      %v756 = vunpack.c.l.b16 %v740
      %v757 = vpack.c.b16 %v756, %v755
      %vm758 = vcmask 31744
      %v760 = vsel %vm758, %v757, 0
      %v763 = vsel %vm684, %v736, 0
      %v766 = vsel %vm684, %v737, 0
      %v769 = vsel %vm684, %v738, 0
      %771 = vmatpush.bf16.msra.mxu0 0
      %772 = vmatpush.bf16.msra.mxu0 0
      %773 = vmatpush.bf16.msra.mxu0 0
      %774 = vmatpush.bf16.msra.mxu0 0
      %775 = vmatpush.bf16.msra.mxu0 0
      %776 = vmatpush.bf16.msra.mxu0 0
      %777 = vmatpush.bf16.msra.mxu0 0
      %778 = vmatpush.bf16.msra.mxu0 %v763
      %779 = vmatmul.bf16.gmra.mxu0 %v760
      %v780 = vpop.f32.mrf.mxu0
      %v781 = vadd.f32 %v746, %v780
      %v782 = vpop.f32.mrf.mxu0
      %v783 = vadd.f32 %v751, %v782
      %784 = vdwg.mxu0
      %785 = vmatpush.bf16.msra.mxu0 0
      %786 = vmatpush.bf16.msra.mxu0 0
      %787 = vmatpush.bf16.msra.mxu0 0
      %788 = vmatpush.bf16.msra.mxu0 0
      %789 = vmatpush.bf16.msra.mxu0 0
      %790 = vmatpush.bf16.msra.mxu0 0
      %791 = vmatpush.bf16.msra.mxu0 0
      %792 = vmatpush.bf16.msra.mxu0 %v766
      %793 = vmatmul.bf16.gmra.mxu0 %v760
      %v794 = vpop.f32.mrf.mxu0
      %v795 = vadd.f32 %v746, %v794
      %v796 = vpop.f32.mrf.mxu0
      %v797 = vadd.f32 %v751, %v796
      %798 = vdwg.mxu0
      %799 = vmatpush.bf16.msra.mxu0 0
      %800 = vmatpush.bf16.msra.mxu0 0
      %801 = vmatpush.bf16.msra.mxu0 0
      %802 = vmatpush.bf16.msra.mxu0 0
      %803 = vmatpush.bf16.msra.mxu0 0
      %804 = vmatpush.bf16.msra.mxu0 0
      %805 = vmatpush.bf16.msra.mxu0 0
      %806 = vmatpush.bf16.msra.mxu0 %v769
      %807 = vmatmul.bf16.gmra.mxu0 %v760
      %v808 = vpop.f32.mrf.mxu0
      %v809 = vadd.f32 %v746, %v808
      %v810 = vpop.f32.mrf.mxu0
      %v811 = vadd.f32 %v751, %v810
      %812 = vdwg.mxu0
      %813 = vst [vmem:[%s354] sm:$0xff] %v781
      %814 = vst [vmem:[%s354 + $0x8] sm:$0xff] %v795
      %815 = vst [vmem:[%s354 + $0x10] sm:$0xff] %v809
      %816 = vst [vmem:[%s354 + $0x18] sm:$0x7f] %v783
      %817 = vst [vmem:[%s354 + $0x20] sm:$0x7f] %v797
      %818 = vst [vmem:[%s354 + $0x28] sm:$0x7f] %v811
      %s819 = smul.u32 3, %s22
      %p820 = scmp.lt.s32.totalorder %s21, 1
      %s821 = scalar_select %p820, %s21, 1
      %p822 = scmp.lt.s32.totalorder %s819, 2
      %s823 = scalar_select %p822, %s819, 2
      %s824 = smul.addr %s821, 6
      %s825 = sadd.s32 %s823, %s824
      %s826 = smul.addr %s825, 8
      %s827 = scalar_lea.vmem %s6, %s826
      // Predicated region
      $region45: #{_rpn_head_level.1} parent=43 // pred_check
        %p828 = pneg %p193
      $region46: #{_rpn_head_level.1} parent=43 // pred_check_branch
        %830 = sbr.rel (%p828) target = $region48
      $region47: #{_rpn_head_level.1} parent=43 // pred_region
        %s831 = smul.u32 3, %s22
      $region48: #{_rpn_head_level.1} parent=43 // pred_fallthru
        _
    $region44: #{_rpn_head_level.1} parent=5 // pred_fallthru
      _
    %p832 = scmp.le.s32.totalorder 2, %s12
    // Predicated region
    $region49: #{_rpn_head_level.1} parent=5 // pred_check
      %p833 = pneg %p832
    $region50: #{_rpn_head_level.1} parent=5 // pred_check_branch
      %835 = sbr.rel (%p833) target = $region52
    $region51: #{_rpn_head_level.1} parent=5 // pred_region
      %s836 = ssub.s32 %s12, 2
      // Predicated region
      $region53: #{_rpn_head_level.1} parent=51 // pred_check
        %p837 = pneg %p199
      $region54: #{_rpn_head_level.1} parent=51 // pred_check_branch
        %839 = sbr.rel (%p837) target = $region56
      $region55: #{_rpn_head_level.1} parent=51 // pred_region
        %s840 = smul.u32 3, %s24
        %p841 = scmp.lt.s32.totalorder %s23, 1
        %s842 = scalar_select %p841, %s23, 1
        %p843 = scmp.lt.s32.totalorder %s840, 2
        %s844 = scalar_select %p843, %s840, 2
        %s845 = smul.addr %s842, 6
        %s846 = sadd.s32 %s844, %s845
        %s847 = smul.addr %s846, 8
        %s848 = scalar_lea.vmem %s6, %s847
      $region56: #{_rpn_head_level.1} parent=51 // pred_fallthru
        _
    $region52: #{_rpn_head_level.1} parent=5 // pred_fallthru
      _
  $region6: #{_rpn_head_level.1} parent=0 // loop_footer
    %s16 = sadd.s32 1, %s12
  $region7: #{_rpn_head_level.1} parent=0 // loop_footer_branch
    %11 = sbr.rel target = $region3
  $region8: #{_rpn_head_level.1} parent=0 // loop_exit
    _

</llo_original>
